<compile_context>
chip_gen: v7x
topology: tpu7x:2x2x1
jax: 0.10.0
libtpu: 0.0.40
codegen_flags: <defaults>
</compile_context>

<pallas_src>
import functools

import jax
import jax.numpy as jnp
from jax.experimental import pallas as pl
from jax.experimental.pallas import tpu as pltpu

HIDDEN = 256          # fixed by the module definition (nn.Linear(.., 256))
OUT_PAD = 8           # final layer out_features=1, padded to 8 lanes
SUBLANE = 8
MAX_TB = 512          # batch tile (rows) for the pipelined grid


def _round_up(x, m):
    return (x + m - 1) // m * m


def q_mlp_kernel(s_ref, a_ref, w1s_ref, w1a_ref, b1_ref, w2_ref, b2_ref,
                 w3_ref, b3_ref, o_ref):
    """One batch tile of the 3-layer MLP. Weights stay resident across tiles."""
    s = s_ref[...].astype(jnp.bfloat16)                      # (TB, state_dim)
    a = a_ref[...].astype(jnp.bfloat16)                      # (TB, action_dim)

    # Layer 1: split matmul replaces the concat([state, action]).
    h1 = (jnp.dot(s, w1s_ref[...], preferred_element_type=jnp.float32)
          + jnp.dot(a, w1a_ref[...], preferred_element_type=jnp.float32)
          + b1_ref[...])
    h1 = jnp.maximum(h1, 0.0)                                # ReLU in f32

    # Layer 2.
    h2 = jnp.dot(h1.astype(jnp.bfloat16), w2_ref[...],
                 preferred_element_type=jnp.float32) + b2_ref[...]
    h2 = jnp.maximum(h2, 0.0)

    # Layer 3 (out_features padded to OUT_PAD lanes; column 0 is real).
    q = jnp.dot(h2.astype(jnp.bfloat16), w3_ref[...],
                preferred_element_type=jnp.float32) + b3_ref[...]
    o_ref[...] = q                                           # (TB, OUT_PAD)


@jax.jit
def q_forward(state, action, prepared_params):
    """Pallas equivalent of Q.forward(state, action) -> (B, 1)."""
    w1s, w1a, b1, w2, b2, w3p, b3p = prepared_params
    B, state_dim = state.shape
    action_dim = action.shape[1]

    # Batch tiling: pad batch to a multiple of the tile, grid over tiles.
    TB = min(MAX_TB, _round_up(B, SUBLANE))
    Bp = _round_up(B, TB)
    state_p = jnp.zeros((Bp, state_dim), jnp.float32).at[:B].set(
        state.astype(jnp.float32))
    action_p = jnp.zeros((Bp, action_dim), jnp.float32).at[:B].set(
        action.astype(jnp.float32))

    grid = (Bp // TB,)
    out = pl.pallas_call(
        q_mlp_kernel,
        out_shape=jax.ShapeDtypeStruct((Bp, OUT_PAD), jnp.float32),
        grid=grid,
        in_specs=[
            pl.BlockSpec((TB, state_dim), lambda i: (i, 0)),        # state tile
            pl.BlockSpec((TB, action_dim), lambda i: (i, 0)),       # action tile
            pl.BlockSpec((state_dim, HIDDEN), lambda i: (0, 0)),    # w1 (state part)
            pl.BlockSpec((action_dim, HIDDEN), lambda i: (0, 0)),   # w1 (action part)
            pl.BlockSpec((1, HIDDEN), lambda i: (0, 0)),            # b1
            pl.BlockSpec((HIDDEN, HIDDEN), lambda i: (0, 0)),       # w2
            pl.BlockSpec((1, HIDDEN), lambda i: (0, 0)),            # b2
            pl.BlockSpec((HIDDEN, OUT_PAD), lambda i: (0, 0)),      # w3 (padded)
            pl.BlockSpec((1, OUT_PAD), lambda i: (0, 0)),           # b3 (padded)
        ],
        out_specs=pl.BlockSpec((TB, OUT_PAD), lambda i: (i, 0)),
        compiler_params=pltpu.CompilerParams(
            dimension_semantics=("parallel",),      # batch tiles -> both TCs on v7x
            vmem_limit_bytes=32 * 1024 * 1024,      # safe on v5e/v6e/v7x
        ),
    )(state_p, action_p, w1s, w1a, b1, w2, b2, w3p, b3p)

    return out[:B, :1]                                              # (B, 1)


def init_q_params(key, state_dim, action_dim):
    """Deterministic synthetic init matching nn.Linear shapes (stored transposed, f32)."""
    d_in = state_dim + action_dim
    k1, k2, k3, k4, k5, k6 = jax.random.split(key, 6)

    def lin(kw, kb, fan_in, fan_out):
        bound = 1.0 / jnp.sqrt(fan_in)
        w = jax.random.uniform(kw, (fan_in, fan_out), jnp.float32, -bound, bound)
        b = jax.random.uniform(kb, (fan_out,), jnp.float32, -bound, bound)
        return w, b

    w1, b1 = lin(k1, k2, d_in, HIDDEN)
    w2, b2 = lin(k3, k4, HIDDEN, HIDDEN)
    w3, b3 = lin(k5, k6, HIDDEN, 1)
    return (w1, b1, w2, b2, w3, b3)


def prepare_q_params(params, state_dim):
    """One-time layout/dtype prep (hoisted out of the forward pass).

    - splits w1 into state / action halves (replaces the runtime concat),
    - casts weights to bf16 (halves weight DMA; matmuls accumulate in f32),
    - pads the 1-wide final layer to OUT_PAD lanes,
    - reshapes biases to (1, N) f32 rows.
    """
    w1, b1, w2, b2, w3, b3 = params
    w1s = w1[:state_dim, :].astype(jnp.bfloat16)
    w1a = w1[state_dim:, :].astype(jnp.bfloat16)
    b1p = b1.reshape(1, HIDDEN).astype(jnp.float32)
    w2p = w2.astype(jnp.bfloat16)
    b2p = b2.reshape(1, HIDDEN).astype(jnp.float32)
    w3p = jnp.zeros((HIDDEN, OUT_PAD), jnp.bfloat16).at[:, :1].set(
        w3.astype(jnp.bfloat16))
    b3p = jnp.zeros((1, OUT_PAD), jnp.float32).at[:, :1].set(b3.reshape(1, 1))
    return (w1s, w1a, b1p, w2p, b2p, w3p, b3p)


def q_reference(state, action, prepared_params):
    """Pure-JAX reference mirroring the kernel's precision (bf16 matmul, f32 accum)."""
    w1s, w1a, b1, w2, b2, w3p, b3p = prepared_params
    s = state.astype(jnp.bfloat16)
    a = action.astype(jnp.bfloat16)
    h1 = jax.nn.relu(jnp.dot(s, w1s, preferred_element_type=jnp.float32)
                     + jnp.dot(a, w1a, preferred_element_type=jnp.float32) + b1)
    h2 = jax.nn.relu(jnp.dot(h1.astype(jnp.bfloat16), w2,
                             preferred_element_type=jnp.float32) + b2)
    q = jnp.dot(h2.astype(jnp.bfloat16), w3p,
                preferred_element_type=jnp.float32) + b3p
    return q[:, :1]


if __name__ == "__main__":
    key = jax.random.PRNGKey(0)
    k_state, k_action, k_params = jax.random.split(key, 3)

    batch, state_dim, action_dim = 2, 17, 6
    state = jax.random.normal(k_state, (batch, state_dim), jnp.float32)
    action = jax.random.normal(k_action, (batch, action_dim), jnp.float32)

    raw_params = init_q_params(k_params, state_dim, action_dim)
    params = prepare_q_params(raw_params, state_dim)   # one-time layout prep

    q = q_forward(state, action, params)
    jax.block_until_ready(q)

    q_ref = q_reference(state, action, params)
    assert q.shape == (batch, 1), q.shape
    assert jnp.allclose(q, q_ref, atol=2e-3, rtol=2e-3), (q, q_ref)

    print("KERNEL_OK")
</pallas_src>

<mosaic_0001>
module attributes {stable_mosaic.version = 11 : i64} {
  func.func @q_mlp_kernel(%arg0: i32, %arg1: memref<8x17xf32, #tpu.memory_space<vmem>>, %arg2: memref<8x6xf32, #tpu.memory_space<vmem>>, %arg3: memref<17x256xbf16, #tpu.memory_space<vmem>>, %arg4: memref<6x256xbf16, #tpu.memory_space<vmem>>, %arg5: memref<1x256xf32, #tpu.memory_space<vmem>>, %arg6: memref<256x256xbf16, #tpu.memory_space<vmem>>, %arg7: memref<1x256xf32, #tpu.memory_space<vmem>>, %arg8: memref<256x8xbf16, #tpu.memory_space<vmem>>, %arg9: memref<1x8xf32, #tpu.memory_space<vmem>>, %arg10: memref<8x8xf32, #tpu.memory_space<vmem>>) attributes {dimension_semantics = [#tpu.dimension_semantics<parallel>], iteration_bounds = array<i64: 1>, scalar_prefetch = 0 : i64, scratch_operands = 0 : i64, tpu.core_type = #tpu.core_type<tc>, window_params = [{transform_indices = @transform_0, window_bounds = array<i64: 8, 17>}, {transform_indices = @transform_1, window_bounds = array<i64: 8, 6>}, {pipeline_mode = #tpu.pipeline_mode<synchronous>, transform_indices = @transform_2, window_bounds = array<i64: 17, 256>}, {pipeline_mode = #tpu.pipeline_mode<synchronous>, transform_indices = @transform_3, window_bounds = array<i64: 6, 256>}, {pipeline_mode = #tpu.pipeline_mode<synchronous>, transform_indices = @transform_4, window_bounds = array<i64: 1, 256>}, {pipeline_mode = #tpu.pipeline_mode<synchronous>, transform_indices = @transform_5, window_bounds = array<i64: 256, 256>}, {pipeline_mode = #tpu.pipeline_mode<synchronous>, transform_indices = @transform_6, window_bounds = array<i64: 1, 256>}, {pipeline_mode = #tpu.pipeline_mode<synchronous>, transform_indices = @transform_7, window_bounds = array<i64: 256, 8>}, {pipeline_mode = #tpu.pipeline_mode<synchronous>, transform_indices = @transform_8, window_bounds = array<i64: 1, 8>}, {transform_indices = @transform_9, window_bounds = array<i64: 8, 8>}]} {
    %c0 = arith.constant 0 : index
    %c0_0 = arith.constant 0 : index
    %0 = vector.load %arg1[%c0, %c0_0] : memref<8x17xf32, #tpu.memory_space<vmem>>, vector<8x17xf32>
    %1 = arith.truncf %0 : vector<8x17xf32> to vector<8x17xbf16>
    %c0_1 = arith.constant 0 : index
    %c0_2 = arith.constant 0 : index
    %2 = vector.load %arg2[%c0_1, %c0_2] : memref<8x6xf32, #tpu.memory_space<vmem>>, vector<8x6xf32>
    %3 = arith.truncf %2 : vector<8x6xf32> to vector<8x6xbf16>
    %c0_3 = arith.constant 0 : index
    %c0_4 = arith.constant 0 : index
    %4 = vector.load %arg3[%c0_3, %c0_4] : memref<17x256xbf16, #tpu.memory_space<vmem>>, vector<17x256xbf16>
    %cst = arith.constant dense<0.000000e+00> : vector<8x256xf32>
    %5 = tpu.matmul %1, %4, %cst {dimension_numbers = #tpu.dot_dimension_numbers<[1], [0], [0], [1], [0, 0, 1, 1], [], []>} : vector<8x17xbf16>, vector<17x256xbf16>, vector<8x256xf32> -> vector<8x256xf32>
    %c0_5 = arith.constant 0 : index
    %c0_6 = arith.constant 0 : index
    %6 = vector.load %arg4[%c0_5, %c0_6] : memref<6x256xbf16, #tpu.memory_space<vmem>>, vector<6x256xbf16>
    %cst_7 = arith.constant dense<0.000000e+00> : vector<8x256xf32>
    %7 = tpu.matmul %3, %6, %cst_7 {dimension_numbers = #tpu.dot_dimension_numbers<[1], [0], [0], [1], [0, 0, 1, 1], [], []>} : vector<8x6xbf16>, vector<6x256xbf16>, vector<8x256xf32> -> vector<8x256xf32>
    %8 = arith.addf %5, %7 : vector<8x256xf32>
    %c0_8 = arith.constant 0 : index
    %c0_9 = arith.constant 0 : index
    %9 = vector.load %arg5[%c0_8, %c0_9] : memref<1x256xf32, #tpu.memory_space<vmem>>, vector<1x256xf32>
    %10 = vector.broadcast %9 : vector<1x256xf32> to vector<8x256xf32>
    %11 = arith.addf %8, %10 : vector<8x256xf32>
    %cst_10 = arith.constant 0.000000e+00 : f32
    %12 = vector.broadcast %cst_10 : f32 to vector<8x256xf32>
    %13 = arith.maximumf %11, %12 : vector<8x256xf32>
    %14 = arith.truncf %13 : vector<8x256xf32> to vector<8x256xbf16>
    %c0_11 = arith.constant 0 : index
    %c0_12 = arith.constant 0 : index
    %15 = vector.load %arg6[%c0_11, %c0_12] : memref<256x256xbf16, #tpu.memory_space<vmem>>, vector<256x256xbf16>
    %cst_13 = arith.constant dense<0.000000e+00> : vector<8x256xf32>
    %16 = tpu.matmul %14, %15, %cst_13 {dimension_numbers = #tpu.dot_dimension_numbers<[1], [0], [0], [1], [0, 0, 1, 1], [], []>} : vector<8x256xbf16>, vector<256x256xbf16>, vector<8x256xf32> -> vector<8x256xf32>
    %c0_14 = arith.constant 0 : index
    %c0_15 = arith.constant 0 : index
    %17 = vector.load %arg7[%c0_14, %c0_15] : memref<1x256xf32, #tpu.memory_space<vmem>>, vector<1x256xf32>
    %18 = vector.broadcast %17 : vector<1x256xf32> to vector<8x256xf32>
    %19 = arith.addf %16, %18 : vector<8x256xf32>
    %cst_16 = arith.constant 0.000000e+00 : f32
    %20 = vector.broadcast %cst_16 : f32 to vector<8x256xf32>
    %21 = arith.maximumf %19, %20 : vector<8x256xf32>
    %22 = arith.truncf %21 : vector<8x256xf32> to vector<8x256xbf16>
    %c0_17 = arith.constant 0 : index
    %c0_18 = arith.constant 0 : index
    %23 = vector.load %arg8[%c0_17, %c0_18] : memref<256x8xbf16, #tpu.memory_space<vmem>>, vector<256x8xbf16>
    %cst_19 = arith.constant dense<0.000000e+00> : vector<8x8xf32>
    %24 = tpu.matmul %22, %23, %cst_19 {dimension_numbers = #tpu.dot_dimension_numbers<[1], [0], [0], [1], [0, 0, 1, 1], [], []>} : vector<8x256xbf16>, vector<256x8xbf16>, vector<8x8xf32> -> vector<8x8xf32>
    %c0_20 = arith.constant 0 : index
    %c0_21 = arith.constant 0 : index
    %25 = vector.load %arg9[%c0_20, %c0_21] : memref<1x8xf32, #tpu.memory_space<vmem>>, vector<1x8xf32>
    %26 = vector.broadcast %25 : vector<1x8xf32> to vector<8x8xf32>
    %27 = arith.addf %24, %26 : vector<8x8xf32>
    %c0_22 = arith.constant 0 : index
    %c0_23 = arith.constant 0 : index
    %28 = vector.load %arg10[%c0_22, %c0_23] : memref<8x8xf32, #tpu.memory_space<vmem>>, vector<8x8xf32>
    tpu.vector_store %arg10[%c0_22, %c0_23], %27 {strides = array<i32>} : memref<8x8xf32, #tpu.memory_space<vmem>>, vector<8x8xf32>,
    return
  }
  func.func @transform_0(%arg0: i32) -> (i32, i32) {
    %c0_i32 = arith.constant 0 : i32
    %c0_i32_0 = arith.constant 0 : i32
    return %arg0, %c0_i32 : i32, i32
  }
  func.func @transform_1(%arg0: i32) -> (i32, i32) {
    %c0_i32 = arith.constant 0 : i32
    %c0_i32_0 = arith.constant 0 : i32
    return %arg0, %c0_i32 : i32, i32
  }
  func.func @transform_2(%arg0: i32) -> (i32, i32) {
    %c0_i32 = arith.constant 0 : i32
    %c0_i32_0 = arith.constant 0 : i32
    %c0_i32_1 = arith.constant 0 : i32
    return %c0_i32, %c0_i32_0 : i32, i32
  }
  func.func @transform_3(%arg0: i32) -> (i32, i32) {
    %c0_i32 = arith.constant 0 : i32
    %c0_i32_0 = arith.constant 0 : i32
    %c0_i32_1 = arith.constant 0 : i32
    return %c0_i32, %c0_i32_0 : i32, i32
  }
  func.func @transform_4(%arg0: i32) -> (i32, i32) {
    %c0_i32 = arith.constant 0 : i32
    %c0_i32_0 = arith.constant 0 : i32
    %c0_i32_1 = arith.constant 0 : i32
    return %c0_i32, %c0_i32_0 : i32, i32
  }
  func.func @transform_5(%arg0: i32) -> (i32, i32) {
    %c0_i32 = arith.constant 0 : i32
    %c0_i32_0 = arith.constant 0 : i32
    %c0_i32_1 = arith.constant 0 : i32
    return %c0_i32, %c0_i32_0 : i32, i32
  }
  func.func @transform_6(%arg0: i32) -> (i32, i32) {
    %c0_i32 = arith.constant 0 : i32
    %c0_i32_0 = arith.constant 0 : i32
    %c0_i32_1 = arith.constant 0 : i32
    return %c0_i32, %c0_i32_0 : i32, i32
  }
  func.func @transform_7(%arg0: i32) -> (i32, i32) {
    %c0_i32 = arith.constant 0 : i32
    %c0_i32_0 = arith.constant 0 : i32
    %c0_i32_1 = arith.constant 0 : i32
    return %c0_i32, %c0_i32_0 : i32, i32
  }
  func.func @transform_8(%arg0: i32) -> (i32, i32) {
    %c0_i32 = arith.constant 0 : i32
    %c0_i32_0 = arith.constant 0 : i32
    %c0_i32_1 = arith.constant 0 : i32
    return %c0_i32, %c0_i32_0 : i32, i32
  }
  func.func @transform_9(%arg0: i32) -> (i32, i32) {
    %c0_i32 = arith.constant 0 : i32
    %c0_i32_0 = arith.constant 0 : i32
    return %arg0, %c0_i32 : i32, i32
  }
}

</mosaic_0001>

<llo_original>
// kernel: q_forward.1
$region0: #{q_forward.1}
  #allocation0 [shape = 'u32[]', space=smem, size = 0x4, offset = 0x4, fixed_abs, tag = 'smem constant byte address 0x4 - core index']
  #allocation1 [shape = 'u32[144,128]{1,0:T(1,128)}', space=vmem, size = 0x12000, scoped, tag = 'internal scratch']
  %s0 = inlined_call_operand.vmem [shape: f32[8,17], index: 0, kind: input, shape index: {}]
  %s1 = inlined_call_operand.vmem [shape: f32[8,6], index: 1, kind: input, shape index: {}]
  %s2 = inlined_call_operand.vmem [shape: bf16[17,256], index: 2, kind: input, shape index: {}]
  %s3 = inlined_call_operand.vmem [shape: bf16[6,256], index: 3, kind: input, shape index: {}]
  %s4 = inlined_call_operand.vmem [shape: f32[1,256], index: 4, kind: input, shape index: {}]
  %s5 = inlined_call_operand.hbm [shape: bf16[256,256], index: 5, kind: input, shape index: {}]
  %s6 = inlined_call_operand.vmem [shape: f32[1,256], index: 6, kind: input, shape index: {}]
  %s7 = inlined_call_operand.vmem [shape: bf16[256,8], index: 7, kind: input, shape index: {}]
  %s8 = inlined_call_operand.vmem [shape: f32[1,8], index: 8, kind: input, shape index: {}]
  %s9 = inlined_call_operand.vmem [shape: f32[8,8], index: 9, kind: output, shape index: {}]
  %s10 = sld [smem:[#allocation0]]
  $region50: #{q_forward.1} parent=0
    _
  %s12 = ssub.s32 1, %s10
  %s13 = scalar_select 0, %s12, %s10
  $region1: #{q_forward.1} parent=0
    #allocation2 [shape = 'u8[131072]{0}', space=vmem, size = 0x20000, scoped, tag = 'input window, operand 5, single buffered']
    #allocation3 [shape = 's32[1]{0}', space=sflag, size = 0x4, scoped, tag = 'scoped memory for q_forward.1']
    %14 = vsyncpa [#allocation3], 0
    // Predicated region
    $region2: #{q_forward.1} parent=1 // pred_check
      _
    $region3: #{q_forward.1} parent=1 // pred_check_branch
      %16 = sbr.rel (0) target = $region5
    $region4: #{q_forward.1} parent=1 // pred_region
      _
    $region5: #{q_forward.1} parent=1 // pred_fallthru
      _
    // Predicated region
    $region6: #{q_forward.1} parent=1 // pred_check
      _
    $region7: #{q_forward.1} parent=1 // pred_check_branch
      %18 = sbr.rel (0) target = $region9
    $region8: #{q_forward.1} parent=1 // pred_region
      _
    $region9: #{q_forward.1} parent=1 // pred_fallthru
      _
    // Predicated region
    $region10: #{q_forward.1} parent=1 // pred_check
      _
    $region11: #{q_forward.1} parent=1 // pred_check_branch
      %20 = sbr.rel (0) target = $region13
    $region12: #{q_forward.1} parent=1 // pred_region
      _
    $region13: #{q_forward.1} parent=1 // pred_fallthru
      _
    // Predicated region
    $region14: #{q_forward.1} parent=1 // pred_check
      _
    $region15: #{q_forward.1} parent=1 // pred_check_branch
      %22 = sbr.rel (0) target = $region17
    $region16: #{q_forward.1} parent=1 // pred_region
      _
    $region17: #{q_forward.1} parent=1 // pred_fallthru
      _
    // Predicated region
    $region18: #{q_forward.1} parent=1 // pred_check
      _
    $region19: #{q_forward.1} parent=1 // pred_check_branch
      %24 = sbr.rel (0) target = $region21
    $region20: #{q_forward.1} parent=1 // pred_region
      _
    $region21: #{q_forward.1} parent=1 // pred_fallthru
      _
    // Predicated region
    $region22: #{q_forward.1} parent=1 // pred_check
      _
    $region23: #{q_forward.1} parent=1 // pred_check_branch
      %26 = sbr.rel (0) target = $region25
    $region24: #{q_forward.1} parent=1 // pred_region
      %s28 = ssub.s32 4096, 4096
      %29 = vsyncadd [#allocation3], %s28
      %s30 = sshll.u32 [#allocation2], 4
      %s31 = int_to_ptr.vmem [resolvable:$true] %s30
      %36 = dma.hbm_to_vmem [thread:$0]  %s5, 4096, %s31, [#allocation3], 128, 128, 8
    $region25: #{q_forward.1} parent=1 // pred_fallthru
      _
    // Predicated region
    $region26: #{q_forward.1} parent=1 // pred_check
      _
    $region27: #{q_forward.1} parent=1 // pred_check_branch
      %38 = sbr.rel (0) target = $region29
    $region28: #{q_forward.1} parent=1 // pred_region
      _
    $region29: #{q_forward.1} parent=1 // pred_fallthru
      _
    // Predicated region
    $region30: #{q_forward.1} parent=1 // pred_check
      _
    $region31: #{q_forward.1} parent=1 // pred_check_branch
      %40 = sbr.rel (0) target = $region33
    $region32: #{q_forward.1} parent=1 // pred_region
      _
    $region33: #{q_forward.1} parent=1 // pred_fallthru
      _
    // Predicated region
    $region34: #{q_forward.1} parent=1 // pred_check
      _
    $region35: #{q_forward.1} parent=1 // pred_check_branch
      %42 = sbr.rel (0) target = $region37
    $region36: #{q_forward.1} parent=1 // pred_region
      _
    $region37: #{q_forward.1} parent=1 // pred_fallthru
      _
    // Predicated region
    $region38: #{q_forward.1} parent=1 // pred_check
      _
    $region39: #{q_forward.1} parent=1 // pred_check_branch
      %44 = sbr.rel (0) target = $region41
    $region40: #{q_forward.1} parent=1 // pred_region
      %45 = dma.done [#allocation3], 4096
    $region41: #{q_forward.1} parent=1 // pred_fallthru
      _
    %v47 = vld [vmem:[%s0] sm:$0xff]
    %v48 = vpack.c.bf16 %v47, %v47
    %v49 = vld [vmem:[%s1] sm:$0xff]
    %v50 = vpack.c.bf16 %v49, %v49
    %v51 = vld [vmem:[%s2] sm:$0xff]
    %v52 = vld [vmem:[%s2 + $0x8] sm:$0xff]
    %v53 = vld [vmem:[%s2 + $0x10] sm:$0x11]
    %v54 = vld [vmem:[%s3] sm:$0x77]
    %v56 = vunpack.c.l.b16 %v54
    %v57 = vunpack.c.h.b16 %v54
    %v58 = vpack.c.b16 %v56, %v56
    %v59 = vpack.c.b16 %v57, %v57
    %vm60 = vcmask 48128
    %v62 = vsel %vm60, %v50, 0
    %vm64 = vcmask 1042432
    %v66 = vsel %vm64, %v58, 0
    %v69 = vsel %vm64, %v59, 0
    %71 = vmatprep.subr.bf16.mxu0 %v69
    %72 = vmatpush1.bf16.msra.mxu0 %v66
    %73 = vmatprep.subr.bf16.mxu0 0
    %74 = vmatpush1.bf16.msra.mxu0 0
    %75 = vmatprep.subr.bf16.mxu0 0
    %76 = vmatpush1.bf16.msra.mxu0 0
    %77 = vmatprep.subr.bf16.mxu0 0
    %78 = vmatpush1.bf16.msra.mxu0 0
    %79 = vmatprep.subr.bf16.mxu0 0
    %80 = vmatpush1.bf16.msra.mxu0 0
    %81 = vmatprep.subr.bf16.mxu0 0
    %82 = vmatpush1.bf16.msra.mxu0 0
    %83 = vmatprep.subr.bf16.mxu0 0
    %84 = vmatpush1.bf16.msra.mxu0 0
    %85 = vmatprep.subr.bf16.mxu0 0
    %86 = vmatpush1.bf16.msra.mxu0 0
    %87 = vmatprep.subr.bf16.mxu0 0
    %88 = vmatpush1.bf16.msra.mxu0 0
    %89 = vmatprep.subr.bf16.mxu0 0
    %90 = vmatpush1.bf16.msra.mxu0 0
    %91 = vmatprep.subr.bf16.mxu0 0
    %92 = vmatpush1.bf16.msra.mxu0 0
    %93 = vmatprep.subr.bf16.mxu0 0
    %94 = vmatpush1.bf16.msra.mxu0 0
    %95 = vmatprep.subr.bf16.mxu0 0
    %96 = vmatpush1.bf16.msra.mxu0 0
    %97 = vmatprep.subr.bf16.mxu0 0
    %98 = vmatpush1.bf16.msra.mxu0 0
    %99 = vmatprep.subr.bf16.mxu0 0
    %100 = vmatpush1.bf16.msra.mxu0 0
    %101 = vmatprep.subr.bf16.mxu0 0
    %102 = vmatpush1.bf16.msra.mxu0 0
    %103 = vmatprep.mubr.bf16.mxu0 0
    %104 = vmatmul.mubr.bf16.gmra.mrb[0].mxu0 %v62
    %v105 = vpop.f32.mrb[0].mxu0
    %v106 = vadd.f32 0.0, %v105
    %v107 = vpop.f32.mrb[0].mxu0
    %v108 = vadd.f32 0.0, %v107
    %v109 = vpop.f32.mrb[0].mxu0
    %v110 = vpop.f32.mrb[0].mxu0
    %111 = vdwg.mxu0
    %v115 = vunpack.c.l.b16 %v51
    %v116 = vunpack.c.h.b16 %v51
    %v117 = vunpack.c.l.b16 %v52
    %v118 = vunpack.c.h.b16 %v52
    %v119 = vunpack.c.l.b16 %v53
    %v120 = vunpack.c.h.b16 %v53
    %v121 = vpack.c.b16 %v117, %v115
    %v122 = vpack.c.b16 %v118, %v116
    %v123 = vpack.c.b16 %v119, %v119
    %v124 = vpack.c.b16 %v120, %v120
    %vm127 = vcmask 138240
    %v129 = vsel %vm127, %v48, 0
    %vm131 = vcmask 1040384
    %v132 = vsel 0, 4294967295, 65535
    %v133 = vsel %vm131, %v132, 0
    %v135 = vand.u32 %v123, %v133
    %v138 = vand.u32 %v124, %v133
    %140 = vmatprep.subr.bf16.mxu0 %v122
    %141 = vmatpush1.bf16.msra.mxu0 %v121
    %142 = vmatprep.subr.bf16.mxu0 %v138
    %143 = vmatpush1.bf16.msra.mxu0 %v135
    %144 = vmatprep.subr.bf16.mxu0 0
    %145 = vmatpush1.bf16.msra.mxu0 0
    %146 = vmatprep.subr.bf16.mxu0 0
    %147 = vmatpush1.bf16.msra.mxu0 0
    %148 = vmatprep.subr.bf16.mxu0 0
    %149 = vmatpush1.bf16.msra.mxu0 0
    %150 = vmatprep.subr.bf16.mxu0 0
    %151 = vmatpush1.bf16.msra.mxu0 0
    %152 = vmatprep.subr.bf16.mxu0 0
    %153 = vmatpush1.bf16.msra.mxu0 0
    %154 = vmatprep.subr.bf16.mxu0 0
    %155 = vmatpush1.bf16.msra.mxu0 0
    %156 = vmatprep.subr.bf16.mxu0 0
    %157 = vmatpush1.bf16.msra.mxu0 0
    %158 = vmatprep.subr.bf16.mxu0 0
    %159 = vmatpush1.bf16.msra.mxu0 0
    %160 = vmatprep.subr.bf16.mxu0 0
    %161 = vmatpush1.bf16.msra.mxu0 0
    %162 = vmatprep.subr.bf16.mxu0 0
    %163 = vmatpush1.bf16.msra.mxu0 0
    %164 = vmatprep.subr.bf16.mxu0 0
    %165 = vmatpush1.bf16.msra.mxu0 0
    %166 = vmatprep.subr.bf16.mxu0 0
    %167 = vmatpush1.bf16.msra.mxu0 0
    %168 = vmatprep.subr.bf16.mxu0 0
    %169 = vmatpush1.bf16.msra.mxu0 0
    %170 = vmatprep.subr.bf16.mxu0 0
    %171 = vmatpush1.bf16.msra.mxu0 0
    %172 = vmatprep.mubr.bf16.mxu0 0
    %173 = vmatmul.mubr.bf16.gmra.mrb[0].mxu0 %v129
    %v174 = vpop.f32.mrb[0].mxu0
    %v175 = vadd.f32 %v106, %v174
    %v176 = vpop.f32.mrb[0].mxu0
    %v177 = vadd.f32 %v108, %v176
    %v178 = vpop.f32.mrb[0].mxu0
    %v179 = vpop.f32.mrb[0].mxu0
    %180 = vdwg.mxu0
    %v181 = vld [vmem:[%s4] sm:$0x3]
    %v183 = vlaneseq
    %v184 = vshrl.u32 %v183, 7
    %v185 = vsub.s32 0, %v184
    %v186 = vrot.slane %v181, %v185
    %v187 = vlaneseq
    %v188 = vshrl.u32 %v187, 7
    %v189 = vsub.s32 1, %v188
    %v190 = vrot.slane %v181, %v189
    %v193 = vadd.f32 %v175, %v186
    %v194 = vadd.f32 %v177, %v190
    %v195 = vmax.f32 %v193, 0.0
    %v196 = vmax.f32 %v194, 0.0
    %v197 = vpack.c.bf16 %v195, %v195
    %v198 = vpack.c.bf16 %v196, %v196
    %v199 = vld [vmem:[#allocation2] sm:$0xff]
    %v200 = vld [vmem:[#allocation2 + $0x8] sm:$0xff]
    %v201 = vld [vmem:[#allocation2 + $0x10] sm:$0xff]
    %v202 = vld [vmem:[#allocation2 + $0x18] sm:$0xff]
    %v203 = vld [vmem:[#allocation2 + $0x20] sm:$0xff]
    %v204 = vld [vmem:[#allocation2 + $0x28] sm:$0xff]
    %v205 = vld [vmem:[#allocation2 + $0x30] sm:$0xff]
    %v206 = vld [vmem:[#allocation2 + $0x38] sm:$0xff]
    %v207 = vld [vmem:[#allocation2 + $0x40] sm:$0xff]
    %v208 = vld [vmem:[#allocation2 + $0x48] sm:$0xff]
    %v209 = vld [vmem:[#allocation2 + $0x50] sm:$0xff]
    %v210 = vld [vmem:[#allocation2 + $0x58] sm:$0xff]
    %v211 = vld [vmem:[#allocation2 + $0x60] sm:$0xff]
    %v212 = vld [vmem:[#allocation2 + $0x68] sm:$0xff]
    %v213 = vld [vmem:[#allocation2 + $0x70] sm:$0xff]
    %v214 = vld [vmem:[#allocation2 + $0x78] sm:$0xff]
    %v215 = vld [vmem:[#allocation2 + $0x80] sm:$0xff]
    %v216 = vld [vmem:[#allocation2 + $0x88] sm:$0xff]
    %v217 = vld [vmem:[#allocation2 + $0x90] sm:$0xff]
    %v218 = vld [vmem:[#allocation2 + $0x98] sm:$0xff]
    %v219 = vld [vmem:[#allocation2 + $0xa0] sm:$0xff]
    %v220 = vld [vmem:[#allocation2 + $0xa8] sm:$0xff]
    %v221 = vld [vmem:[#allocation2 + $0xb0] sm:$0xff]
    %v222 = vld [vmem:[#allocation2 + $0xb8] sm:$0xff]
    %v223 = vld [vmem:[#allocation2 + $0xc0] sm:$0xff]
    %v224 = vld [vmem:[#allocation2 + $0xc8] sm:$0xff]
    %v225 = vld [vmem:[#allocation2 + $0xd0] sm:$0xff]
    %v226 = vld [vmem:[#allocation2 + $0xd8] sm:$0xff]
    %v227 = vld [vmem:[#allocation2 + $0xe0] sm:$0xff]
    %v228 = vld [vmem:[#allocation2 + $0xe8] sm:$0xff]
    %v229 = vld [vmem:[#allocation2 + $0xf0] sm:$0xff]
    %v230 = vld [vmem:[#allocation2 + $0xf8] sm:$0xff]
    %v231 = vld [vmem:[%s6] sm:$0x3]
    %v233 = vlaneseq
    %v234 = vshrl.u32 %v233, 7
    %v235 = vsub.s32 0, %v234
    %v236 = vrot.slane %v231, %v235
    %v237 = vlaneseq
    %v238 = vshrl.u32 %v237, 7
    %v239 = vsub.s32 1, %v238
    %v240 = vrot.slane %v231, %v239
    %v275 = vunpack.c.l.b16 %v199
    %v276 = vunpack.c.h.b16 %v199
    %v277 = vunpack.c.l.b16 %v200
    %v278 = vunpack.c.h.b16 %v200
    %v279 = vunpack.c.l.b16 %v201
    %v280 = vunpack.c.h.b16 %v201
    %v281 = vunpack.c.l.b16 %v202
    %v282 = vunpack.c.h.b16 %v202
    %v283 = vunpack.c.l.b16 %v203
    %v284 = vunpack.c.h.b16 %v203
    %v285 = vunpack.c.l.b16 %v204
    %v286 = vunpack.c.h.b16 %v204
    %v287 = vunpack.c.l.b16 %v205
    %v288 = vunpack.c.h.b16 %v205
    %v289 = vunpack.c.l.b16 %v206
    %v290 = vunpack.c.h.b16 %v206
    %v291 = vunpack.c.l.b16 %v207
    %v292 = vunpack.c.h.b16 %v207
    %v293 = vunpack.c.l.b16 %v208
    %v294 = vunpack.c.h.b16 %v208
    %v295 = vunpack.c.l.b16 %v209
    %v296 = vunpack.c.h.b16 %v209
    %v297 = vunpack.c.l.b16 %v210
    %v298 = vunpack.c.h.b16 %v210
    %v299 = vunpack.c.l.b16 %v211
    %v300 = vunpack.c.h.b16 %v211
    %v301 = vunpack.c.l.b16 %v212
    %v302 = vunpack.c.h.b16 %v212
    %v303 = vunpack.c.l.b16 %v213
    %v304 = vunpack.c.h.b16 %v213
    %v305 = vunpack.c.l.b16 %v214
    %v306 = vunpack.c.h.b16 %v214
    %v307 = vunpack.c.l.b16 %v215
    %v308 = vunpack.c.h.b16 %v215
    %v309 = vunpack.c.l.b16 %v216
    %v310 = vunpack.c.h.b16 %v216
    %v311 = vunpack.c.l.b16 %v217
    %v312 = vunpack.c.h.b16 %v217
    %v313 = vunpack.c.l.b16 %v218
    %v314 = vunpack.c.h.b16 %v218
    %v315 = vunpack.c.l.b16 %v219
    %v316 = vunpack.c.h.b16 %v219
    %v317 = vunpack.c.l.b16 %v220
    %v318 = vunpack.c.h.b16 %v220
    %v319 = vunpack.c.l.b16 %v221
    %v320 = vunpack.c.h.b16 %v221
    %v321 = vunpack.c.l.b16 %v222
    %v322 = vunpack.c.h.b16 %v222
    %v323 = vunpack.c.l.b16 %v223
    %v324 = vunpack.c.h.b16 %v223
    %v325 = vunpack.c.l.b16 %v224
    %v326 = vunpack.c.h.b16 %v224
    %v327 = vunpack.c.l.b16 %v225
    %v328 = vunpack.c.h.b16 %v225
    %v329 = vunpack.c.l.b16 %v226
    %v330 = vunpack.c.h.b16 %v226
    %v331 = vunpack.c.l.b16 %v227
    %v332 = vunpack.c.h.b16 %v227
    %v333 = vunpack.c.l.b16 %v228
    %v334 = vunpack.c.h.b16 %v228
    %v335 = vunpack.c.l.b16 %v229
    %v336 = vunpack.c.h.b16 %v229
    %v337 = vunpack.c.l.b16 %v230
    %v338 = vunpack.c.h.b16 %v230
    %v339 = vpack.c.b16 %v277, %v275
    %v340 = vpack.c.b16 %v278, %v276
    %v341 = vpack.c.b16 %v281, %v279
    %v342 = vpack.c.b16 %v282, %v280
    %v343 = vpack.c.b16 %v285, %v283
    %v344 = vpack.c.b16 %v286, %v284
    %v345 = vpack.c.b16 %v289, %v287
    %v346 = vpack.c.b16 %v290, %v288
    %v347 = vpack.c.b16 %v293, %v291
    %v348 = vpack.c.b16 %v294, %v292
    %v349 = vpack.c.b16 %v297, %v295
    %v350 = vpack.c.b16 %v298, %v296
    %v351 = vpack.c.b16 %v301, %v299
    %v352 = vpack.c.b16 %v302, %v300
    %v353 = vpack.c.b16 %v305, %v303
    %v354 = vpack.c.b16 %v306, %v304
    %v355 = vpack.c.b16 %v309, %v307
    %v356 = vpack.c.b16 %v310, %v308
    %v357 = vpack.c.b16 %v313, %v311
    %v358 = vpack.c.b16 %v314, %v312
    %v359 = vpack.c.b16 %v317, %v315
    %v360 = vpack.c.b16 %v318, %v316
    %v361 = vpack.c.b16 %v321, %v319
    %v362 = vpack.c.b16 %v322, %v320
    %v363 = vpack.c.b16 %v325, %v323
    %v364 = vpack.c.b16 %v326, %v324
    %v365 = vpack.c.b16 %v329, %v327
    %v366 = vpack.c.b16 %v330, %v328
    %v367 = vpack.c.b16 %v333, %v331
    %v368 = vpack.c.b16 %v334, %v332
    %v369 = vpack.c.b16 %v337, %v335
    %v370 = vpack.c.b16 %v338, %v336
    %403 = vmatprep.subr.bf16.mxu0 %v340
    %404 = vmatpush1.bf16.msra.mxu0 %v339
    %405 = vmatprep.subr.bf16.mxu0 %v342
    %406 = vmatpush1.bf16.msra.mxu0 %v341
    %407 = vmatprep.subr.bf16.mxu0 %v344
    %408 = vmatpush1.bf16.msra.mxu0 %v343
    %409 = vmatprep.subr.bf16.mxu0 %v346
    %410 = vmatpush1.bf16.msra.mxu0 %v345
    %411 = vmatprep.subr.bf16.mxu0 %v348
    %412 = vmatpush1.bf16.msra.mxu0 %v347
    %413 = vmatprep.subr.bf16.mxu0 %v350
    %414 = vmatpush1.bf16.msra.mxu0 %v349
    %415 = vmatprep.subr.bf16.mxu0 %v352
    %416 = vmatpush1.bf16.msra.mxu0 %v351
    %417 = vmatprep.subr.bf16.mxu0 %v354
    %418 = vmatpush1.bf16.msra.mxu0 %v353
    %419 = vmatprep.subr.bf16.mxu0 %v356
    %420 = vmatpush1.bf16.msra.mxu0 %v355
    %421 = vmatprep.subr.bf16.mxu0 %v358
    %422 = vmatpush1.bf16.msra.mxu0 %v357
    %423 = vmatprep.subr.bf16.mxu0 %v360
    %424 = vmatpush1.bf16.msra.mxu0 %v359
    %425 = vmatprep.subr.bf16.mxu0 %v362
    %426 = vmatpush1.bf16.msra.mxu0 %v361
    %427 = vmatprep.subr.bf16.mxu0 %v364
    %428 = vmatpush1.bf16.msra.mxu0 %v363
    %429 = vmatprep.subr.bf16.mxu0 %v366
    %430 = vmatpush1.bf16.msra.mxu0 %v365
    %431 = vmatprep.subr.bf16.mxu0 %v368
    %432 = vmatpush1.bf16.msra.mxu0 %v367
    %433 = vmatprep.subr.bf16.mxu0 %v370
    %434 = vmatpush1.bf16.msra.mxu0 %v369
    %435 = vmatprep.mubr.bf16.mxu0 %v198
    %436 = vmatmul.mubr.bf16.gmra.mrb[0].mxu0 %v197
    %v437 = vpop.f32.mrb[0].mxu0
    %v438 = vadd.f32 %v236, %v437
    %v439 = vpop.f32.mrb[0].mxu0
    %v440 = vadd.f32 %v240, %v439
    %v441 = vpop.f32.mrb[0].mxu0
    %v442 = vpop.f32.mrb[0].mxu0
    %443 = vdwg.mxu0
    %v444 = vmax.f32 %v438, 0.0
    %v445 = vmax.f32 %v440, 0.0
    %v446 = vpack.c.bf16 %v444, %v444
    %v447 = vpack.c.bf16 %v445, %v445
    %v448 = vld [vmem:[%s7] sm:$0xf]
    %v449 = vld [vmem:[%s7 + $0x4] sm:$0xf]
    %v450 = vld [vmem:[%s7 + $0x8] sm:$0xf]
    %v451 = vld [vmem:[%s7 + $0xc] sm:$0xf]
    %v452 = vld [vmem:[%s7 + $0x10] sm:$0xf]
    %v453 = vld [vmem:[%s7 + $0x14] sm:$0xf]
    %v454 = vld [vmem:[%s7 + $0x18] sm:$0xf]
    %v455 = vld [vmem:[%s7 + $0x1c] sm:$0xf]
    %v456 = vld [vmem:[%s7 + $0x20] sm:$0xf]
    %v457 = vld [vmem:[%s7 + $0x24] sm:$0xf]
    %v458 = vld [vmem:[%s7 + $0x28] sm:$0xf]
    %v459 = vld [vmem:[%s7 + $0x2c] sm:$0xf]
    %v460 = vld [vmem:[%s7 + $0x30] sm:$0xf]
    %v461 = vld [vmem:[%s7 + $0x34] sm:$0xf]
    %v462 = vld [vmem:[%s7 + $0x38] sm:$0xf]
    %v463 = vld [vmem:[%s7 + $0x3c] sm:$0xf]
    %v464 = vld [vmem:[%s7 + $0x40] sm:$0xf]
    %v465 = vld [vmem:[%s7 + $0x44] sm:$0xf]
    %v466 = vld [vmem:[%s7 + $0x48] sm:$0xf]
    %v467 = vld [vmem:[%s7 + $0x4c] sm:$0xf]
    %v468 = vld [vmem:[%s7 + $0x50] sm:$0xf]
    %v469 = vld [vmem:[%s7 + $0x54] sm:$0xf]
    %v470 = vld [vmem:[%s7 + $0x58] sm:$0xf]
    %v471 = vld [vmem:[%s7 + $0x5c] sm:$0xf]
    %v472 = vld [vmem:[%s7 + $0x60] sm:$0xf]
    %v473 = vld [vmem:[%s7 + $0x64] sm:$0xf]
    %v474 = vld [vmem:[%s7 + $0x68] sm:$0xf]
    %v475 = vld [vmem:[%s7 + $0x6c] sm:$0xf]
    %v476 = vld [vmem:[%s7 + $0x70] sm:$0xf]
    %v477 = vld [vmem:[%s7 + $0x74] sm:$0xf]
    %v478 = vld [vmem:[%s7 + $0x78] sm:$0xf]
    %v479 = vld [vmem:[%s7 + $0x7c] sm:$0xf]
    %v480 = vld [vmem:[%s8] sm:$0x1]
    %v482 = vlaneseq
    %v483 = vshrl.u32 %v482, 7
    %v484 = vsub.s32 0, %v483
    %v485 = vrot.slane %v480, %v484
    %v519 = vunpack.c.l.b16 %v448
    %v520 = vunpack.c.l.b16 %v449
    %v521 = vunpack.c.l.b16 %v450
    %v522 = vunpack.c.l.b16 %v451
    %v523 = vunpack.c.l.b16 %v452
    %v524 = vunpack.c.l.b16 %v453
    %v525 = vunpack.c.l.b16 %v454
    %v526 = vunpack.c.l.b16 %v455
    %v527 = vunpack.c.l.b16 %v456
    %v528 = vunpack.c.l.b16 %v457
    %v529 = vunpack.c.l.b16 %v458
    %v530 = vunpack.c.l.b16 %v459
    %v531 = vunpack.c.l.b16 %v460
    %v532 = vunpack.c.l.b16 %v461
    %v533 = vunpack.c.l.b16 %v462
    %v534 = vunpack.c.l.b16 %v463
    %v535 = vunpack.c.l.b16 %v464
    %v536 = vunpack.c.l.b16 %v465
    %v537 = vunpack.c.l.b16 %v466
    %v538 = vunpack.c.l.b16 %v467
    %v539 = vunpack.c.l.b16 %v468
    %v540 = vunpack.c.l.b16 %v469
    %v541 = vunpack.c.l.b16 %v470
    %v542 = vunpack.c.l.b16 %v471
    %v543 = vunpack.c.l.b16 %v472
    %v544 = vunpack.c.l.b16 %v473
    %v545 = vunpack.c.l.b16 %v474
    %v546 = vunpack.c.l.b16 %v475
    %v547 = vunpack.c.l.b16 %v476
    %v548 = vunpack.c.l.b16 %v477
    %v549 = vunpack.c.l.b16 %v478
    %v550 = vunpack.c.l.b16 %v479
    %v551 = vpack.c.b16 %v520, %v519
    %v552 = vpack.c.b16 %v522, %v521
    %v553 = vpack.c.b16 %v524, %v523
    %v554 = vpack.c.b16 %v526, %v525
    %v555 = vpack.c.b16 %v528, %v527
    %v556 = vpack.c.b16 %v530, %v529
    %v557 = vpack.c.b16 %v532, %v531
    %v558 = vpack.c.b16 %v534, %v533
    %v559 = vpack.c.b16 %v536, %v535
    %v560 = vpack.c.b16 %v538, %v537
    %v561 = vpack.c.b16 %v540, %v539
    %v562 = vpack.c.b16 %v542, %v541
    %v563 = vpack.c.b16 %v544, %v543
    %v564 = vpack.c.b16 %v546, %v545
    %v565 = vpack.c.b16 %v548, %v547
    %v566 = vpack.c.b16 %v550, %v549
    %583 = vmatprep.subr.bf16.mxu0 0
    %584 = vmatpush1.bf16.msra.mxu0 %v551
    %585 = vmatprep.subr.bf16.mxu0 0
    %586 = vmatpush1.bf16.msra.mxu0 %v552
    %587 = vmatprep.subr.bf16.mxu0 0
    %588 = vmatpush1.bf16.msra.mxu0 %v553
    %589 = vmatprep.subr.bf16.mxu0 0
    %590 = vmatpush1.bf16.msra.mxu0 %v554
    %591 = vmatprep.subr.bf16.mxu0 0
    %592 = vmatpush1.bf16.msra.mxu0 %v555
    %593 = vmatprep.subr.bf16.mxu0 0
    %594 = vmatpush1.bf16.msra.mxu0 %v556
    %595 = vmatprep.subr.bf16.mxu0 0
    %596 = vmatpush1.bf16.msra.mxu0 %v557
    %597 = vmatprep.subr.bf16.mxu0 0
    %598 = vmatpush1.bf16.msra.mxu0 %v558
    %599 = vmatprep.subr.bf16.mxu0 0
    %600 = vmatpush1.bf16.msra.mxu0 %v559
    %601 = vmatprep.subr.bf16.mxu0 0
    %602 = vmatpush1.bf16.msra.mxu0 %v560
    %603 = vmatprep.subr.bf16.mxu0 0
    %604 = vmatpush1.bf16.msra.mxu0 %v561
    %605 = vmatprep.subr.bf16.mxu0 0
    %606 = vmatpush1.bf16.msra.mxu0 %v562
    %607 = vmatprep.subr.bf16.mxu0 0
    %608 = vmatpush1.bf16.msra.mxu0 %v563
    %609 = vmatprep.subr.bf16.mxu0 0
    %610 = vmatpush1.bf16.msra.mxu0 %v564
    %611 = vmatprep.subr.bf16.mxu0 0
    %612 = vmatpush1.bf16.msra.mxu0 %v565
    %613 = vmatprep.subr.bf16.mxu0 0
    %614 = vmatpush1.bf16.msra.mxu0 %v566
    %615 = vmatprep.mubr.bf16.mxu0 %v447
    %616 = vmatmul.mubr.bf16.gmra.mrb[0].mxu0 %v446
    %v617 = vpop.f32.mrb[0].mxu0
    %v618 = vadd.f32 %v485, %v617
    %v619 = vpop.f32.mrb[0].mxu0
    %v620 = vpop.f32.mrb[0].mxu0
    %v621 = vpop.f32.mrb[0].mxu0
    %622 = vdwg.mxu0
    %vm623 = vcmask 64512
    %624 = vst.msk [vmem:[%s9] sm:$0xff] %vm623, %v618
    // Predicated region
    $region42: #{q_forward.1} parent=1 // pred_check
      _
    $region43: #{q_forward.1} parent=1 // pred_check_branch
      %626 = sbr.rel (0) target = $region45
    $region44: #{q_forward.1} parent=1 // pred_region
      _
    $region45: #{q_forward.1} parent=1 // pred_fallthru
      _
    // Predicated region
    $region46: #{q_forward.1} parent=1 // pred_check
      _
    $region47: #{q_forward.1} parent=1 // pred_check_branch
      %628 = sbr.rel (0) target = $region49
    $region48: #{q_forward.1} parent=1 // pred_region
      _
    $region49: #{q_forward.1} parent=1 // pred_fallthru
      _
    %629 = vsyncpa [#allocation3], 1

</llo_original>
